<compile_context>
chip_gen: v6e
topology: v6e:2x2x1
jax: 0.10.0
libtpu: 0.0.40
codegen_flags: <defaults>
</compile_context>

<pallas_src>
import functools

import jax
import jax.numpy as jnp
from jax import lax
from jax.experimental import pallas as pl
from jax.experimental.pallas import tpu as pltpu

_BN_EPS = 1e-5


def _vmem_limit_bytes():
    """Per-generation scoped-VMEM limit (conservative fallback: 32 MiB)."""
    try:
        cap = int(getattr(pltpu.get_tpu_info(), "vmem_capacity_bytes", 0))
    except Exception:
        cap = 0
    if cap >= (128 << 20):          # v5e / v6e: 128 MiB physical VMEM
        return 64 << 20
    if cap > 0:                     # v7x: 64 MiB physical -> leave headroom
        return min(32 << 20, cap // 2)
    return 32 << 20


def _pick_hw_tile(hw, c, itemsize, max_bytes):
    """Lane-dense spatial tile: multiple of 128 (or bounded full extent), <= max_bytes."""
    cap = max(128, (max_bytes // (itemsize * c)) // 128 * 128)
    if hw <= cap:
        return hw                   # bounded full-extent block (always legal)
    # Prefer an exact multiple-of-128 divisor (no ragged tail) as long as the
    # tile stays >= ~cap/2; otherwise accept a masked ragged tail at size cap.
    t = cap
    while t >= max(128, cap // 2):
        if hw % t == 0:
            return t
        t -= 128
    return cap


# ---------------------------------------------------------------------------
# Fused single-kernel path: whole activation resident in VMEM (1 read + 1 write)
# ---------------------------------------------------------------------------
def _fused_kernel(x_ref, gamma_ref, beta_ref, o_ref, *, count):
    x = x_ref[...].astype(jnp.float32)                        # (N, C, HW)
    s = jnp.sum(jnp.sum(x, axis=2, keepdims=True), axis=0, keepdims=True)
    sq = jnp.sum(jnp.sum(x * x, axis=2, keepdims=True), axis=0, keepdims=True)
    inv_m = 1.0 / count
    mean = s * inv_m                                           # (1, C, 1)
    var = jnp.maximum(sq * inv_m - mean * mean, 0.0)           # biased, clamped
    inv_std = lax.rsqrt(var + _BN_EPS)
    gamma = gamma_ref[...].astype(jnp.float32)                 # (1, C, 1)
    beta = beta_ref[...].astype(jnp.float32)
    abs_g = jnp.abs(gamma)
    w_bn = abs_g / jnp.sum(abs_g, axis=1, keepdims=True)
    # Fold BN + channel-attention weight into one per-channel affine: a*x + b.
    a = w_bn * gamma * inv_std
    b = w_bn * (beta - gamma * mean * inv_std)
    z = a * x + b
    att = 0.5 * jnp.tanh(0.5 * z) + 0.5                        # exact sigmoid, 1 EUP op
    o_ref[...] = (att * x).astype(o_ref.dtype)


# ---------------------------------------------------------------------------
# Tiled path, pass 1: per-block partial moments (no cross-step dependency)
# ---------------------------------------------------------------------------
def _stats_kernel(x_ref, psum_ref, psq_ref, *, hw, thw):
    x = x_ref[0].astype(jnp.float32)                           # (C, THW)
    if hw % thw != 0:                                          # mask ragged lane tail
        j = pl.program_id(1)
        col = j * thw + lax.broadcasted_iota(jnp.int32, x.shape, 1)
        x = jnp.where(col < hw, x, 0.0)
    psum_ref[0, 0] = jnp.sum(x, axis=1, keepdims=True)         # (C, 1)
    psq_ref[0, 0] = jnp.sum(x * x, axis=1, keepdims=True)


# ---------------------------------------------------------------------------
# Tiled path, pass 2: out = sigmoid(a*x + b) * x
# ---------------------------------------------------------------------------
def _apply_kernel(x_ref, a_ref, b_ref, o_ref):
    x = x_ref[0].astype(jnp.float32)                           # (C, THW)
    z = a_ref[...] * x + b_ref[...]                            # per-channel affine
    att = 0.5 * jnp.tanh(0.5 * z) + 0.5                        # exact sigmoid, 1 EUP op
    o_ref[0] = (att * x).astype(o_ref.dtype)


def channel_att(x_nchw, gamma, beta, *, force_tiled=False, max_tile_bytes=None):
    """x_nchw: (N, C, H, W); gamma/beta: (C,). Returns (N, C, H, W)."""
    n, c, h, w = x_nchw.shape
    hw = h * w
    x3 = x_nchw.reshape(n, c, hw)                              # free reshape (NCHW order)
    count = float(n * hw)
    vmem_limit = _vmem_limit_bytes()

    # ---- fused path: whole activation fits comfortably on-chip ----
    if not force_tiled and (n * c * hw * 4) * 6 <= vmem_limit:
        g3 = gamma.reshape(1, c, 1).astype(jnp.float32)
        b3 = beta.reshape(1, c, 1).astype(jnp.float32)
        out3 = pl.pallas_call(
            functools.partial(_fused_kernel, count=count),
            out_shape=jax.ShapeDtypeStruct((n, c, hw), x_nchw.dtype),
            compiler_params=pltpu.CompilerParams(vmem_limit_bytes=vmem_limit),
        )(x3, g3, b3)
        return out3.reshape(n, c, h, w)

    # ---- tiled two-pass path ----
    itemsize = x_nchw.dtype.itemsize
    if max_tile_bytes is None:
        max_tile_bytes = min(4 << 20, vmem_limit // 8)
    thw = _pick_hw_tile(hw, c, itemsize, max_tile_bytes)
    n_hw = pl.cdiv(hw, thw)

    g2 = gamma.reshape(c, 1).astype(jnp.float32)
    b2 = beta.reshape(c, 1).astype(jnp.float32)

    x_spec = pl.BlockSpec((1, c, thw), lambda i, j: (i, 0, j))
    part_spec = pl.BlockSpec((1, 1, c, 1), lambda i, j: (i, j, 0, 0))
    chan_spec = pl.BlockSpec((c, 1), lambda i, j: (0, 0))

    # pass 1: fully-parallel per-block partial moments (megacore-friendly on v7x)
    psum, psq = pl.pallas_call(
        functools.partial(_stats_kernel, hw=hw, thw=thw),
        out_shape=(jax.ShapeDtypeStruct((n, n_hw, c, 1), jnp.float32),
                   jax.ShapeDtypeStruct((n, n_hw, c, 1), jnp.float32)),
        grid_spec=pltpu.PrefetchScalarGridSpec(
            num_scalar_prefetch=0,
            grid=(n, n_hw),
            in_specs=[x_spec],
            out_specs=[part_spec, part_spec]),
        compiler_params=pltpu.CompilerParams(
            dimension_semantics=("parallel", "parallel"),
            vmem_limit_bytes=vmem_limit),
    )(x3)

    # Tiny combine in plain JAX (n * n_hw * c elements): BN stats -> fused affine.
    s = jnp.sum(psum, axis=(0, 1))                             # (C, 1)
    sq = jnp.sum(psq, axis=(0, 1))
    inv_m = 1.0 / count
    mean = s * inv_m
    var = jnp.maximum(sq * inv_m - mean * mean, 0.0)           # biased, clamped
    inv_std = lax.rsqrt(var + _BN_EPS)
    abs_g = jnp.abs(g2)
    w_bn = abs_g / jnp.sum(abs_g)
    a_coef = (w_bn * g2 * inv_std).astype(jnp.float32)
    b_coef = (w_bn * (b2 - g2 * mean * inv_std)).astype(jnp.float32)

    # pass 2: elementwise apply, fully parallel, auto double-buffered pipeline
    out3 = pl.pallas_call(
        _apply_kernel,
        out_shape=jax.ShapeDtypeStruct((n, c, hw), x_nchw.dtype),
        grid_spec=pltpu.PrefetchScalarGridSpec(
            num_scalar_prefetch=0,
            grid=(n, n_hw),
            in_specs=[x_spec, chan_spec, chan_spec],
            out_specs=x_spec),
        compiler_params=pltpu.CompilerParams(
            dimension_semantics=("parallel", "parallel"),
            vmem_limit_bytes=vmem_limit),
    )(x3, a_coef, b_coef)

    return out3.reshape(n, c, h, w)


def _reference(x, gamma, beta):
    """Plain-JAX reference with PyTorch training-mode BN semantics."""
    c = x.shape[1]
    mean = x.mean(axis=(0, 2, 3), keepdims=True)
    var = ((x - mean) ** 2).mean(axis=(0, 2, 3), keepdims=True)   # biased
    y = (x - mean) / jnp.sqrt(var + _BN_EPS) * gamma.reshape(1, c, 1, 1) \
        + beta.reshape(1, c, 1, 1)
    w_bn = (jnp.abs(gamma) / jnp.sum(jnp.abs(gamma))).reshape(1, c, 1, 1)
    return jax.nn.sigmoid(w_bn * y) * x


if __name__ == "__main__":
    key = jax.random.PRNGKey(0)
    c = 4
    # Deterministic non-trivial BN parameters (PyTorch default is gamma=1, beta=0).
    gamma = 0.5 + 0.1 * jnp.arange(c, dtype=jnp.float32)
    beta = 0.01 * jnp.arange(c, dtype=jnp.float32)

    k1, k2 = jax.random.split(key)
    ok = True

    # 1) fused (VMEM-resident) path.
    x1 = jax.random.normal(k1, (2, c, 16, 16), dtype=jnp.float32)
    out1 = channel_att(x1, gamma, beta)
    jax.block_until_ready(out1)
    ref1 = _reference(x1, gamma, beta)
    ok &= bool(jnp.allclose(out1, ref1, atol=2e-3, rtol=2e-3))

    # 2) tiled two-pass path (bounded full-extent spatial block).
    out2 = channel_att(x1, gamma, beta, force_tiled=True)
    jax.block_until_ready(out2)
    ok &= bool(jnp.allclose(out2, ref1, atol=2e-3, rtol=2e-3))

    # 3) tiled path with a ragged (non-multiple-of-128) spatial tail + masking.
    x3 = jax.random.normal(k2, (2, c, 10, 20), dtype=jnp.float32)   # H*W = 200
    out3 = channel_att(x3, gamma, beta, force_tiled=True,
                       max_tile_bytes=128 * c * 4)                  # forces thw = 128
    jax.block_until_ready(out3)
    ref3 = _reference(x3, gamma, beta)
    ok &= bool(jnp.allclose(out3, ref3, atol=2e-3, rtol=2e-3))

    assert ok, "mismatch vs reference"
    print("KERNEL_OK")
</pallas_src>

<mosaic_0001>
module attributes {stable_mosaic.version = 11 : i64} {
  func.func @_fused_kernel(%arg0: memref<2x4x256xf32, #tpu.memory_space<vmem>>, %arg1: memref<1x4x1xf32, #tpu.memory_space<vmem>>, %arg2: memref<1x4x1xf32, #tpu.memory_space<vmem>>, %arg3: memref<2x4x256xf32, #tpu.memory_space<vmem>>) attributes {dimension_semantics = [], scalar_prefetch = 0 : i64, scratch_operands = 0 : i64, tpu.core_type = #tpu.core_type<tc>} {
    %c0 = arith.constant 0 : index
    %c0_0 = arith.constant 0 : index
    %c0_1 = arith.constant 0 : index
    %0 = vector.load %arg0[%c0, %c0_0, %c0_1] : memref<2x4x256xf32, #tpu.memory_space<vmem>>, vector<2x4x256xf32>
    %cst = arith.constant dense<0.000000e+00> : vector<2x4xf32>
    %1 = vector.multi_reduction <add>, %0, %cst [2] : vector<2x4x256xf32> to vector<2x4xf32>
    %2 = vector.shape_cast %1 : vector<2x4xf32> to vector<2x4x1xf32>
    %cst_2 = arith.constant dense<0.000000e+00> : vector<4x1xf32>
    %3 = vector.multi_reduction <add>, %2, %cst_2 [0] : vector<2x4x1xf32> to vector<4x1xf32>
    %4 = vector.shape_cast %3 : vector<4x1xf32> to vector<1x4x1xf32>
    %5 = arith.mulf %0, %0 : vector<2x4x256xf32>
    %cst_3 = arith.constant dense<0.000000e+00> : vector<2x4xf32>
    %6 = vector.multi_reduction <add>, %5, %cst_3 [2] : vector<2x4x256xf32> to vector<2x4xf32>
    %7 = vector.shape_cast %6 : vector<2x4xf32> to vector<2x4x1xf32>
    %cst_4 = arith.constant dense<0.000000e+00> : vector<4x1xf32>
    %8 = vector.multi_reduction <add>, %7, %cst_4 [0] : vector<2x4x1xf32> to vector<4x1xf32>
    %9 = vector.shape_cast %8 : vector<4x1xf32> to vector<1x4x1xf32>
    %cst_5 = arith.constant 0.001953125 : f32
    %10 = vector.broadcast %cst_5 : f32 to vector<1x4x1xf32>
    %11 = arith.mulf %4, %10 : vector<1x4x1xf32>
    %cst_6 = arith.constant 0.001953125 : f32
    %12 = vector.broadcast %cst_6 : f32 to vector<1x4x1xf32>
    %13 = arith.mulf %9, %12 : vector<1x4x1xf32>
    %14 = arith.mulf %11, %11 : vector<1x4x1xf32>
    %15 = arith.subf %13, %14 : vector<1x4x1xf32>
    %cst_7 = arith.constant 0.000000e+00 : f32
    %16 = vector.broadcast %cst_7 : f32 to vector<1x4x1xf32>
    %17 = arith.maximumf %15, %16 : vector<1x4x1xf32>
    %cst_8 = arith.constant 9.99999974E-6 : f32
    %18 = vector.broadcast %cst_8 : f32 to vector<1x4x1xf32>
    %19 = arith.addf %17, %18 : vector<1x4x1xf32>
    %20 = math.rsqrt %19 : vector<1x4x1xf32>
    %c0_9 = arith.constant 0 : index
    %c0_10 = arith.constant 0 : index
    %c0_11 = arith.constant 0 : index
    %21 = vector.load %arg1[%c0_9, %c0_10, %c0_11] : memref<1x4x1xf32, #tpu.memory_space<vmem>>, vector<1x4x1xf32>
    %c0_12 = arith.constant 0 : index
    %c0_13 = arith.constant 0 : index
    %c0_14 = arith.constant 0 : index
    %22 = vector.load %arg2[%c0_12, %c0_13, %c0_14] : memref<1x4x1xf32, #tpu.memory_space<vmem>>, vector<1x4x1xf32>
    %23 = math.absf %21 : vector<1x4x1xf32>
    %cst_15 = arith.constant dense<0.000000e+00> : vector<1x1xf32>
    %24 = vector.multi_reduction <add>, %23, %cst_15 [1] : vector<1x4x1xf32> to vector<1x1xf32>
    %25 = vector.shape_cast %24 : vector<1x1xf32> to vector<1x1x1xf32>
    %26 = vector.broadcast %25 : vector<1x1x1xf32> to vector<1x4x1xf32>
    %27 = arith.divf %23, %26 : vector<1x4x1xf32>
    %28 = arith.mulf %27, %21 : vector<1x4x1xf32>
    %29 = arith.mulf %28, %20 : vector<1x4x1xf32>
    %30 = arith.mulf %21, %11 : vector<1x4x1xf32>
    %31 = arith.mulf %30, %20 : vector<1x4x1xf32>
    %32 = arith.subf %22, %31 : vector<1x4x1xf32>
    %33 = arith.mulf %27, %32 : vector<1x4x1xf32>
    %34 = vector.broadcast %29 : vector<1x4x1xf32> to vector<2x4x256xf32>
    %35 = arith.mulf %34, %0 : vector<2x4x256xf32>
    %36 = vector.broadcast %33 : vector<1x4x1xf32> to vector<2x4x256xf32>
    %37 = arith.addf %35, %36 : vector<2x4x256xf32>
    %cst_16 = arith.constant 5.000000e-01 : f32
    %38 = vector.broadcast %cst_16 : f32 to vector<2x4x256xf32>
    %39 = arith.mulf %38, %37 : vector<2x4x256xf32>
    %40 = math.tanh %39 : vector<2x4x256xf32>
    %cst_17 = arith.constant 5.000000e-01 : f32
    %41 = vector.broadcast %cst_17 : f32 to vector<2x4x256xf32>
    %42 = arith.mulf %41, %40 : vector<2x4x256xf32>
    %cst_18 = arith.constant 5.000000e-01 : f32
    %43 = vector.broadcast %cst_18 : f32 to vector<2x4x256xf32>
    %44 = arith.addf %42, %43 : vector<2x4x256xf32>
    %45 = arith.mulf %44, %0 : vector<2x4x256xf32>
    %c0_19 = arith.constant 0 : index
    %c0_20 = arith.constant 0 : index
    %c0_21 = arith.constant 0 : index
    %46 = vector.load %arg3[%c0_19, %c0_20, %c0_21] : memref<2x4x256xf32, #tpu.memory_space<vmem>>, vector<2x4x256xf32>
    tpu.vector_store %arg3[%c0_19, %c0_20, %c0_21], %45 {strides = array<i32>} : memref<2x4x256xf32, #tpu.memory_space<vmem>>, vector<2x4x256xf32>,
    return
  }
}

</mosaic_0001>

<llo_original>
// kernel: tpu_custom_call.1
$region0: #{tpu_custom_call.1}
  #allocation0 [shape = 'u32[]', space=smem, size = 0x4, offset = 0x4, fixed_abs, tag = 'smem constant byte address 0x4 - core index']
  #allocation1 [shape = 'u32[144,128]{1,0:T(1,128)}', space=vmem, size = 0x12000, scoped, tag = 'internal scratch']
  %s0 = inlined_call_operand.hbm [shape: f32[2,4,256], index: 0, kind: input, shape index: {}]
  %s1 = inlined_call_operand.vmem [shape: f32[1,4,1], index: 1, kind: input, shape index: {}]
  %s2 = inlined_call_operand.vmem [shape: f32[1,4,1], index: 2, kind: input, shape index: {}]
  %s3 = inlined_call_operand.hbm [shape: f32[2,4,256], index: 3, kind: output, shape index: {}]
  %s4 = sld [smem:[#allocation0]]
  $region26: #{tpu_custom_call.1} parent=0
    _
  %s6 = ssub.s32 1, %s4
  %s7 = scalar_select 0, %s6, %s4
  $region1: #{tpu_custom_call.1} parent=0
    #allocation2 [shape = 'u8[8192]{0}', space=vmem, size = 0x2000, scoped, tag = 'input window, operand 0, single buffered']
    #allocation3 [shape = 's32[1]{0}', space=sflag, size = 0x4, scoped, tag = 'scoped memory for tpu_custom_call.1']
    #allocation4 [shape = 's32[1]{0}', space=sflag, size = 0x4, scoped, tag = 'scoped memory for tpu_custom_call.1']
    #allocation5 [shape = 'u8[8192]{0}', space=vmem, size = 0x2000, scoped, tag = 'output window, operand 0, single buffered']
    %8 = vsyncpa [#allocation3], 0
    %9 = vsyncpa [#allocation4], 0
    // Predicated region
    $region2: #{tpu_custom_call.1} parent=1 // pred_check
      _
    $region3: #{tpu_custom_call.1} parent=1 // pred_check_branch
      %11 = sbr.rel (0) target = $region5
    $region4: #{tpu_custom_call.1} parent=1 // pred_region
      %s13 = ssub.s32 256, 256
      %14 = vsyncadd [#allocation3], %s13
      %s15 = sshll.u32 [#allocation2], 4
      %s16 = int_to_ptr.vmem [resolvable:$true] %s15
      %21 = dma.hbm_to_vmem [thread:$0]  %s0, 256, %s16, [#allocation3], 128, 128, 8
    $region5: #{tpu_custom_call.1} parent=1 // pred_fallthru
      _
    // Predicated region
    $region6: #{tpu_custom_call.1} parent=1 // pred_check
      _
    $region7: #{tpu_custom_call.1} parent=1 // pred_check_branch
      %23 = sbr.rel (0) target = $region9
    $region8: #{tpu_custom_call.1} parent=1 // pred_region
      _
    $region9: #{tpu_custom_call.1} parent=1 // pred_fallthru
      _
    // Predicated region
    $region10: #{tpu_custom_call.1} parent=1 // pred_check
      _
    $region11: #{tpu_custom_call.1} parent=1 // pred_check_branch
      %25 = sbr.rel (0) target = $region13
    $region12: #{tpu_custom_call.1} parent=1 // pred_region
      _
    $region13: #{tpu_custom_call.1} parent=1 // pred_fallthru
      _
    // Predicated region
    $region14: #{tpu_custom_call.1} parent=1 // pred_check
      _
    $region15: #{tpu_custom_call.1} parent=1 // pred_check_branch
      %27 = sbr.rel (0) target = $region17
    $region16: #{tpu_custom_call.1} parent=1 // pred_region
      %28 = dma.done [#allocation3], 256
    $region17: #{tpu_custom_call.1} parent=1 // pred_fallthru
      _
    %v29 = vld [vmem:[#allocation2] sm:$0xff]
    %v30 = vld [vmem:[#allocation2 + $0x8] sm:$0xff]
    %v33 = vcombine.high %v29, %v29
    %v34 = vcombine.high %v30, %v30
    %vm37 = vcmask 1043456
    %v38 = vsel %vm37, %v29, 0.0
    %v39 = vsel %vm37, %v33, 0.0
    %v40 = vadd.f32 %v38, %v39
    %41 = vadd.xlane.f32.xlu0 %v40
    %v42 = vpop.xlane.xlu0 %41
    %v43 = vsel %vm37, %v30, 0.0
    %v44 = vsel %vm37, %v34, 0.0
    %v45 = vadd.f32 %v43, %v44
    %46 = vadd.xlane.f32.xlu0 %v45
    %v47 = vpop.xlane.xlu0 %46
    %v48 = vsel %vm37, %v42, 0.0
    %v49 = vsel %vm37, %v47, 0.0
    %v50 = vadd.f32 %v48, %v49
    %v51 = vmul.f32 %v29, %v29
    %v52 = vmul.f32 %v30, %v30
    %v55 = vcombine.high %v51, %v51
    %v56 = vcombine.high %v52, %v52
    %v59 = vsel %vm37, %v51, 0.0
    %v60 = vsel %vm37, %v55, 0.0
    %v61 = vadd.f32 %v59, %v60
    %62 = vadd.xlane.f32.xlu0 %v61
    %v63 = vpop.xlane.xlu0 %62
    %v64 = vsel %vm37, %v52, 0.0
    %v65 = vsel %vm37, %v56, 0.0
    %v66 = vadd.f32 %v64, %v65
    %67 = vadd.xlane.f32.xlu0 %v66
    %v68 = vpop.xlane.xlu0 %67
    %v69 = vsel %vm37, %v63, 0.0
    %v70 = vsel %vm37, %v68, 0.0
    %v71 = vadd.f32 %v69, %v70
    %v72 = vmul.f32 %v50, 0.001953125
    %v73 = vmul.f32 %v71, 0.001953125
    %v74 = vmul.f32 %v72, %v72
    %v75 = vsub.f32 %v73, %v74
    %v76 = vmax.f32 %v75, 0.0
    %v77 = vadd.f32 %v76, 1e-05
    %v78 = vrsqrt.pop %v77
    %v79 = vld [vmem:[%s1] sm:$0xf]
    %v80 = vld [vmem:[%s2] sm:$0xf]
    %v81 = vand.u32 2147483647, %v79
    %vm82 = vcmask 3072
    %v83 = vsel %vm82, %v81, 0.0
    %v84 = vrot.slane %v83, 4
    %v85 = vadd.f32 %v83, %v84
    %v86 = vrot.slane %v85, 2
    %v87 = vadd.f32 %v85, %v86
    %v88 = vrot.slane %v87, 1
    %v89 = vadd.f32 %v87, %v88
    %v90 = vrcp.pop %v89
    %v91 = vmul.f32 %v81, %v90
    %v92 = vmul.f32 %v91, %v79
    %v93 = vmul.f32 %v92, %v78
    %v94 = vmul.f32 %v79, %v72
    %v95 = vmul.f32 %v94, %v78
    %v96 = vsub.f32 %v80, %v95
    %v97 = vmul.f32 %v91, %v96
    %99 = vset.pattern.permute.xlu0 0
    %100 = vperm.xlu0 %99, %v93
    %v101 = vpop.permute.xlu0 %100
    %v103 = vmul.f32 %v101, %v29
    %v104 = vmul.f32 %v101, %v33
    %v105 = vmul.f32 %v101, %v30
    %v106 = vmul.f32 %v101, %v34
    %108 = vset.pattern.permute.xlu0 0
    %109 = vperm.xlu0 %108, %v97
    %v110 = vpop.permute.xlu0 %109
    %v112 = vadd.f32 %v103, %v110
    %v113 = vadd.f32 %v104, %v110
    %v114 = vadd.f32 %v105, %v110
    %v115 = vadd.f32 %v106, %v110
    %v116 = vmul.f32 %v112, 0.5
    %v117 = vmul.f32 %v113, 0.5
    %v118 = vmul.f32 %v114, 0.5
    %v119 = vmul.f32 %v115, 0.5
    %v120 = vtanh.pop %v116
    %v121 = vtanh.pop %v117
    %v122 = vtanh.pop %v118
    %v123 = vtanh.pop %v119
    %v124 = vmul.f32 %v120, 0.5
    %v125 = vmul.f32 %v121, 0.5
    %v126 = vmul.f32 %v122, 0.5
    %v127 = vmul.f32 %v123, 0.5
    %v128 = vadd.f32 %v124, 0.5
    %v129 = vadd.f32 %v125, 0.5
    %v130 = vadd.f32 %v126, 0.5
    %v131 = vadd.f32 %v127, 0.5
    %v132 = vmul.f32 %v128, %v29
    %v133 = vmul.f32 %v129, %v33
    %v134 = vmul.f32 %v130, %v30
    %v135 = vmul.f32 %v131, %v34
    %v140 = vcombine.low %v132, %v133
    %v141 = vcombine.low %v134, %v135
    %144 = vst [vmem:[#allocation5] sm:$0xff] %v140
    %145 = vst [vmem:[#allocation5 + $0x8] sm:$0xff] %v141
    // Predicated region
    $region18: #{tpu_custom_call.1} parent=1 // pred_check
      _
    $region19: #{tpu_custom_call.1} parent=1 // pred_check_branch
      %147 = sbr.rel (0) target = $region21
    $region20: #{tpu_custom_call.1} parent=1 // pred_region
      %s149 = ssub.s32 256, 256
      %150 = vsyncadd [#allocation4], %s149
      %s151 = sshll.u32 [#allocation5], 4
      %s152 = int_to_ptr.vmem [resolvable:$true] %s151
      %157 = dma.vmem_to_hbm [thread:$0]  %s152, 256, %s3, [#allocation4], 128, 128, 8
    $region21: #{tpu_custom_call.1} parent=1 // pred_fallthru
      _
    // Predicated region
    $region22: #{tpu_custom_call.1} parent=1 // pred_check
      _
    $region23: #{tpu_custom_call.1} parent=1 // pred_check_branch
      %159 = sbr.rel (0) target = $region25
    $region24: #{tpu_custom_call.1} parent=1 // pred_region
      %160 = dma.done [#allocation4], 256
    $region25: #{tpu_custom_call.1} parent=1 // pred_fallthru
      _
    %161 = vsyncpa [#allocation3], 1
    %162 = vsyncpa [#allocation4], 1

</llo_original>
